<compile_context>
chip_gen: v7x
topology: tpu7x:2x2x1
jax: 0.10.0
libtpu: 0.0.40
codegen_flags: <defaults>
</compile_context>

<pallas_src>
import functools

import jax
import jax.numpy as jnp
from jax.experimental import pallas as pl
from jax.experimental.pallas import tpu as pltpu

N_LANES = 128       # fused head output padded to a multiple of the lane width
TILE_B_MAX = 256    # batch tile (multiple of 8) -- amortizes pipeline step cost


def _round_up(x, m):
    return ((x + m - 1) // m) * m


def actor_critic_kernel(obs_ref,
                        w0_ref, b0_ref,
                        w1_ref, b1_ref,
                        wh_ref, bh_ref,
                        out_ref, *, act_dim):
    """Fused MLP: 2x (Linear+ReLU) -> fused actor|critic head -> softmax + value.

    out_ref lanes: [0, act_dim) = softmax probs, lane act_dim = critic value,
    remaining lanes = zero padding (sliced off in the JAX wrapper).
    """
    x = obs_ref[...]                                          # bf16 [TB, in_dim]

    # hidden layer 0 (bf16 MXU operands, f32 accumulate / elementwise)
    h = jnp.dot(x, w0_ref[...], preferred_element_type=jnp.float32) + b0_ref[...]
    h = jnp.maximum(h, 0.0)

    # hidden layer 1
    h = jnp.dot(h.astype(jnp.bfloat16), w1_ref[...],
                preferred_element_type=jnp.float32) + b1_ref[...]
    h = jnp.maximum(h, 0.0)

    # fused actor+critic head: one MXU pass -> [TB, N_PAD]
    head = jnp.dot(h.astype(jnp.bfloat16), wh_ref[...],
                   preferred_element_type=jnp.float32) + bh_ref[...]

    # numerically-stable softmax over the first act_dim lanes only
    col = jax.lax.broadcasted_iota(jnp.int32, head.shape, 1)
    logits = jnp.where(col < act_dim, head, -jnp.inf)
    m = jnp.max(logits, axis=-1, keepdims=True)
    e = jnp.exp(logits - m)                                   # 0.0 in masked lanes
    inv = pl.reciprocal(jnp.sum(e, axis=-1, keepdims=True), approx=False)
    probs = e * inv

    # single lane-dense store: probs in lanes [0, act_dim), value in lane act_dim
    out_ref[...] = probs + jnp.where(col == act_dim, head, 0.0)


def actor_critic_forward(obs, packed):
    """Calls the Pallas kernel; mirrors the PyTorch forward outputs."""
    act_dim = packed["act_dim"]
    w0, b0 = packed["w0"], packed["b0"]
    w1, b1 = packed["w1"], packed["b1"]
    wh, bh = packed["wh"], packed["bh"]
    n_pad = wh.shape[1]

    B, in_dim = obs.shape
    tile_b = min(TILE_B_MAX, _round_up(B, 8))
    b_padded = _round_up(B, tile_b)

    obs_bf16 = obs.astype(jnp.bfloat16)
    if b_padded != B:
        obs_bf16 = jnp.pad(obs_bf16, ((0, b_padded - B), (0, 0)))

    grid = (b_padded // tile_b,)
    const = lambda i: (0, 0)   # weights/biases: same block every step -> resident

    out = pl.pallas_call(
        functools.partial(actor_critic_kernel, act_dim=act_dim),
        out_shape=jax.ShapeDtypeStruct((b_padded, n_pad), jnp.float32),
        grid_spec=pltpu.PrefetchScalarGridSpec(
            num_scalar_prefetch=0,
            grid=grid,
            in_specs=[
                pl.BlockSpec((tile_b, in_dim), lambda i: (i, 0)),   # obs tile
                pl.BlockSpec(w0.shape, const),
                pl.BlockSpec(b0.shape, const),
                pl.BlockSpec(w1.shape, const),
                pl.BlockSpec(b1.shape, const),
                pl.BlockSpec(wh.shape, const),
                pl.BlockSpec(bh.shape, const),
            ],
            out_specs=pl.BlockSpec((tile_b, n_pad), lambda i: (i, 0)),
        ),
        compiler_params=pltpu.CompilerParams(
            dimension_semantics=("parallel",)),
    )(obs_bf16, w0, b0, w1, b1, wh, bh)

    out = out[:B]
    probs = out[:, :act_dim]
    value = out[:, act_dim]                       # == torch.squeeze(value, -1)
    probs_out = jnp.squeeze(probs, -1) if act_dim == 1 else probs
    return probs_out, value


def init_params(key, input_dim, act_dim, hidden_sizes):
    """PyTorch-like init, then pack for the kernel:
       - weights pre-transposed to [in, out] and cast to bf16
       - biases kept f32 as [1, out] for lane broadcast
       - actor (wpi) and critic (wv) heads fused and zero-padded to N_LANES."""
    assert len(hidden_sizes) == 2, "kernel is specialized to 2 hidden layers"
    sizes = [input_dim] + hidden_sizes
    keys = jax.random.split(key, 2 * len(hidden_sizes) + 4)
    ki = 0

    def linear(kw, kb, fan_in, fan_out):
        bound = 1.0 / jnp.sqrt(fan_in)
        w = jax.random.uniform(kw, (fan_in, fan_out), jnp.float32, -bound, bound)
        b = jax.random.uniform(kb, (1, fan_out), jnp.float32, -bound, bound)
        return w, b

    raw = {}
    for i in range(len(sizes) - 1):
        raw[f"w{i}"], raw[f"b{i}"] = linear(keys[ki], keys[ki + 1],
                                            sizes[i], sizes[i + 1])
        ki += 2
    wpi, bpi = linear(keys[ki], keys[ki + 1], hidden_sizes[-1], act_dim)
    ki += 2
    wv, bv = linear(keys[ki], keys[ki + 1], hidden_sizes[-1], 1)

    # fuse heads: columns [0, act_dim) actor, column act_dim critic, rest zero
    n_pad = _round_up(act_dim + 1, N_LANES)
    hdim = hidden_sizes[-1]
    wh = jnp.zeros((hdim, n_pad), jnp.float32)
    wh = wh.at[:, :act_dim].set(wpi).at[:, act_dim:act_dim + 1].set(wv)
    bh = jnp.zeros((1, n_pad), jnp.float32)
    bh = bh.at[:, :act_dim].set(bpi).at[:, act_dim:act_dim + 1].set(bv)

    packed = {
        "w0": raw["w0"].astype(jnp.bfloat16), "b0": raw["b0"],
        "w1": raw["w1"].astype(jnp.bfloat16), "b1": raw["b1"],
        "wh": wh.astype(jnp.bfloat16), "bh": bh,
        "act_dim": act_dim,
    }
    return packed


def reference_forward(obs, packed):
    """Pure-JAX reference using the same bf16 operand rounding as the kernel."""
    act_dim = packed["act_dim"]
    f32 = jnp.float32
    x = obs.astype(jnp.bfloat16).astype(f32)
    h = jnp.maximum(x @ packed["w0"].astype(f32) + packed["b0"], 0.0)
    h = jnp.maximum(h.astype(jnp.bfloat16).astype(f32) @ packed["w1"].astype(f32)
                    + packed["b1"], 0.0)
    head = (h.astype(jnp.bfloat16).astype(f32) @ packed["wh"].astype(f32)
            + packed["bh"])
    probs = jax.nn.softmax(head[:, :act_dim], axis=-1)
    value = head[:, act_dim]
    return probs, value


if __name__ == "__main__":
    # Small shapes consistent with the module (obs-vector MLP). For real A2C
    # rollouts, batch many observations per call (B >= 256) -- at tiny batches
    # this kernel is launch-overhead bound.
    batch = 8
    input_dim = 16
    act_dim = 8
    hidden_sizes = [32, 32]

    key = jax.random.PRNGKey(0)
    k_obs, k_params = jax.random.split(key)

    obs = jax.random.normal(k_obs, (batch, input_dim), dtype=jnp.float32)
    packed = init_params(k_params, input_dim, act_dim, hidden_sizes)

    probs, value = actor_critic_forward(obs, packed)
    jax.block_until_ready((probs, value))

    # sanity: shapes match torch semantics, probs rows sum to ~1, matches ref
    assert probs.shape == (batch, act_dim)
    assert value.shape == (batch,)
    assert jnp.allclose(jnp.sum(probs, axis=-1), 1.0, atol=1e-5)

    ref_probs, ref_value = reference_forward(obs, packed)
    assert jnp.allclose(probs, ref_probs, atol=1e-3, rtol=1e-3)
    assert jnp.allclose(value, ref_value, atol=1e-3, rtol=1e-3)

    print("KERNEL_OK")
</pallas_src>

<mosaic_0001>
module attributes {stable_mosaic.version = 11 : i64} {
  func.func @actor_critic_kernel(%arg0: i32, %arg1: memref<8x16xbf16, #tpu.memory_space<vmem>>, %arg2: memref<16x32xbf16, #tpu.memory_space<vmem>>, %arg3: memref<1x32xf32, #tpu.memory_space<vmem>>, %arg4: memref<32x32xbf16, #tpu.memory_space<vmem>>, %arg5: memref<1x32xf32, #tpu.memory_space<vmem>>, %arg6: memref<32x128xbf16, #tpu.memory_space<vmem>>, %arg7: memref<1x128xf32, #tpu.memory_space<vmem>>, %arg8: memref<8x128xf32, #tpu.memory_space<vmem>>) attributes {dimension_semantics = [#tpu.dimension_semantics<parallel>], iteration_bounds = array<i64: 1>, scalar_prefetch = 0 : i64, scratch_operands = 0 : i64, tpu.core_type = #tpu.core_type<tc>, window_params = [{transform_indices = @transform_0, window_bounds = array<i64: 8, 16>}, {pipeline_mode = #tpu.pipeline_mode<synchronous>, transform_indices = @transform_1, window_bounds = array<i64: 16, 32>}, {pipeline_mode = #tpu.pipeline_mode<synchronous>, transform_indices = @transform_2, window_bounds = array<i64: 1, 32>}, {pipeline_mode = #tpu.pipeline_mode<synchronous>, transform_indices = @transform_3, window_bounds = array<i64: 32, 32>}, {pipeline_mode = #tpu.pipeline_mode<synchronous>, transform_indices = @transform_4, window_bounds = array<i64: 1, 32>}, {pipeline_mode = #tpu.pipeline_mode<synchronous>, transform_indices = @transform_5, window_bounds = array<i64: 32, 128>}, {pipeline_mode = #tpu.pipeline_mode<synchronous>, transform_indices = @transform_6, window_bounds = array<i64: 1, 128>}, {transform_indices = @transform_7, window_bounds = array<i64: 8, 128>}]} {
    %c0 = arith.constant 0 : index
    %c0_0 = arith.constant 0 : index
    %0 = vector.load %arg1[%c0, %c0_0] : memref<8x16xbf16, #tpu.memory_space<vmem>>, vector<8x16xbf16>
    %c0_1 = arith.constant 0 : index
    %c0_2 = arith.constant 0 : index
    %1 = vector.load %arg2[%c0_1, %c0_2] : memref<16x32xbf16, #tpu.memory_space<vmem>>, vector<16x32xbf16>
    %cst = arith.constant dense<0.000000e+00> : vector<8x32xf32>
    %2 = tpu.matmul %0, %1, %cst {dimension_numbers = #tpu.dot_dimension_numbers<[1], [0], [0], [1], [0, 0, 1, 1], [], []>} : vector<8x16xbf16>, vector<16x32xbf16>, vector<8x32xf32> -> vector<8x32xf32>
    %c0_3 = arith.constant 0 : index
    %c0_4 = arith.constant 0 : index
    %3 = vector.load %arg3[%c0_3, %c0_4] : memref<1x32xf32, #tpu.memory_space<vmem>>, vector<1x32xf32>
    %4 = vector.broadcast %3 : vector<1x32xf32> to vector<8x32xf32>
    %5 = arith.addf %2, %4 : vector<8x32xf32>
    %cst_5 = arith.constant 0.000000e+00 : f32
    %6 = vector.broadcast %cst_5 : f32 to vector<8x32xf32>
    %7 = arith.maximumf %5, %6 : vector<8x32xf32>
    %8 = arith.truncf %7 : vector<8x32xf32> to vector<8x32xbf16>
    %c0_6 = arith.constant 0 : index
    %c0_7 = arith.constant 0 : index
    %9 = vector.load %arg4[%c0_6, %c0_7] : memref<32x32xbf16, #tpu.memory_space<vmem>>, vector<32x32xbf16>
    %cst_8 = arith.constant dense<0.000000e+00> : vector<8x32xf32>
    %10 = tpu.matmul %8, %9, %cst_8 {dimension_numbers = #tpu.dot_dimension_numbers<[1], [0], [0], [1], [0, 0, 1, 1], [], []>} : vector<8x32xbf16>, vector<32x32xbf16>, vector<8x32xf32> -> vector<8x32xf32>
    %c0_9 = arith.constant 0 : index
    %c0_10 = arith.constant 0 : index
    %11 = vector.load %arg5[%c0_9, %c0_10] : memref<1x32xf32, #tpu.memory_space<vmem>>, vector<1x32xf32>
    %12 = vector.broadcast %11 : vector<1x32xf32> to vector<8x32xf32>
    %13 = arith.addf %10, %12 : vector<8x32xf32>
    %cst_11 = arith.constant 0.000000e+00 : f32
    %14 = vector.broadcast %cst_11 : f32 to vector<8x32xf32>
    %15 = arith.maximumf %13, %14 : vector<8x32xf32>
    %16 = arith.truncf %15 : vector<8x32xf32> to vector<8x32xbf16>
    %c0_12 = arith.constant 0 : index
    %c0_13 = arith.constant 0 : index
    %17 = vector.load %arg6[%c0_12, %c0_13] : memref<32x128xbf16, #tpu.memory_space<vmem>>, vector<32x128xbf16>
    %cst_14 = arith.constant dense<0.000000e+00> : vector<8x128xf32>
    %18 = tpu.matmul %16, %17, %cst_14 {dimension_numbers = #tpu.dot_dimension_numbers<[1], [0], [0], [1], [0, 0, 1, 1], [], []>} : vector<8x32xbf16>, vector<32x128xbf16>, vector<8x128xf32> -> vector<8x128xf32>
    %c0_15 = arith.constant 0 : index
    %c0_16 = arith.constant 0 : index
    %19 = vector.load %arg7[%c0_15, %c0_16] : memref<1x128xf32, #tpu.memory_space<vmem>>, vector<1x128xf32>
    %20 = vector.broadcast %19 : vector<1x128xf32> to vector<8x128xf32>
    %21 = arith.addf %18, %20 : vector<8x128xf32>
    %22 = tpu.iota {dimensions = array<i32: 1>} : vector<8x128xi32>
    %c8_i32 = arith.constant 8 : i32
    %23 = vector.broadcast %c8_i32 : i32 to vector<8x128xi32>
    %24 = arith.cmpi slt, %22, %23 : vector<8x128xi32>
    %cst_17 = arith.constant 0xFF800000 : f32
    %25 = vector.broadcast %cst_17 : f32 to vector<8x128xf32>
    %26 = arith.select %24, %21, %25 : vector<8x128xi1>, vector<8x128xf32>
    %cst_18 = arith.constant dense<0xFF800000> : vector<8xf32>
    %27 = vector.multi_reduction <maximumf>, %26, %cst_18 [1] : vector<8x128xf32> to vector<8xf32>
    %28 = vector.shape_cast %27 : vector<8xf32> to vector<8x1xf32>
    %29 = vector.broadcast %28 : vector<8x1xf32> to vector<8x128xf32>
    %30 = arith.subf %26, %29 : vector<8x128xf32>
    %31 = math.exp %30 : vector<8x128xf32>
    %cst_19 = arith.constant dense<0.000000e+00> : vector<8xf32>
    %32 = vector.multi_reduction <add>, %31, %cst_19 [1] : vector<8x128xf32> to vector<8xf32>
    %33 = vector.shape_cast %32 : vector<8xf32> to vector<8x1xf32>
    %34 = tpu.reciprocal %33 : vector<8x1xf32> -> vector<8x1xf32>
    %35 = vector.broadcast %34 : vector<8x1xf32> to vector<8x128xf32>
    %36 = arith.mulf %31, %35 : vector<8x128xf32>
    %c8_i32_20 = arith.constant 8 : i32
    %37 = vector.broadcast %c8_i32_20 : i32 to vector<8x128xi32>
    %38 = arith.cmpi eq, %22, %37 : vector<8x128xi32>
    %cst_21 = arith.constant 0.000000e+00 : f32
    %39 = vector.broadcast %cst_21 : f32 to vector<8x128xf32>
    %40 = arith.select %38, %21, %39 : vector<8x128xi1>, vector<8x128xf32>
    %41 = arith.addf %36, %40 : vector<8x128xf32>
    %c0_22 = arith.constant 0 : index
    %c0_23 = arith.constant 0 : index
    %42 = vector.load %arg8[%c0_22, %c0_23] : memref<8x128xf32, #tpu.memory_space<vmem>>, vector<8x128xf32>
    tpu.vector_store %arg8[%c0_22, %c0_23], %41 {strides = array<i32>} : memref<8x128xf32, #tpu.memory_space<vmem>>, vector<8x128xf32>,
    return
  }
  func.func @transform_0(%arg0: i32) -> (i32, i32) {
    %c0_i32 = arith.constant 0 : i32
    %c0_i32_0 = arith.constant 0 : i32
    return %arg0, %c0_i32 : i32, i32
  }
  func.func @transform_1(%arg0: i32) -> (i32, i32) {
    %c0_i32 = arith.constant 0 : i32
    %c0_i32_0 = arith.constant 0 : i32
    %c0_i32_1 = arith.constant 0 : i32
    return %c0_i32, %c0_i32_0 : i32, i32
  }
  func.func @transform_2(%arg0: i32) -> (i32, i32) {
    %c0_i32 = arith.constant 0 : i32
    %c0_i32_0 = arith.constant 0 : i32
    %c0_i32_1 = arith.constant 0 : i32
    return %c0_i32, %c0_i32_0 : i32, i32
  }
  func.func @transform_3(%arg0: i32) -> (i32, i32) {
    %c0_i32 = arith.constant 0 : i32
    %c0_i32_0 = arith.constant 0 : i32
    %c0_i32_1 = arith.constant 0 : i32
    return %c0_i32, %c0_i32_0 : i32, i32
  }
  func.func @transform_4(%arg0: i32) -> (i32, i32) {
    %c0_i32 = arith.constant 0 : i32
    %c0_i32_0 = arith.constant 0 : i32
    %c0_i32_1 = arith.constant 0 : i32
    return %c0_i32, %c0_i32_0 : i32, i32
  }
  func.func @transform_5(%arg0: i32) -> (i32, i32) {
    %c0_i32 = arith.constant 0 : i32
    %c0_i32_0 = arith.constant 0 : i32
    %c0_i32_1 = arith.constant 0 : i32
    return %c0_i32, %c0_i32_0 : i32, i32
  }
  func.func @transform_6(%arg0: i32) -> (i32, i32) {
    %c0_i32 = arith.constant 0 : i32
    %c0_i32_0 = arith.constant 0 : i32
    %c0_i32_1 = arith.constant 0 : i32
    return %c0_i32, %c0_i32_0 : i32, i32
  }
  func.func @transform_7(%arg0: i32) -> (i32, i32) {
    %c0_i32 = arith.constant 0 : i32
    %c0_i32_0 = arith.constant 0 : i32
    return %arg0, %c0_i32 : i32, i32
  }
}

</mosaic_0001>

<llo_original>
// kernel: tpu_custom_call.1
$region0: #{tpu_custom_call.1}
  #allocation0 [shape = 'u32[]', space=smem, size = 0x4, offset = 0x4, fixed_abs, tag = 'smem constant byte address 0x4 - core index']
  #allocation1 [shape = 'u32[144,128]{1,0:T(1,128)}', space=vmem, size = 0x12000, scoped, tag = 'internal scratch']
  %s0 = inlined_call_operand.hbm [shape: bf16[8,16], index: 0, kind: input, shape index: {}]
  %s1 = inlined_call_operand.hbm [shape: bf16[16,32], index: 1, kind: input, shape index: {}]
  %s2 = inlined_call_operand.vmem [shape: f32[1,32], index: 2, kind: input, shape index: {}]
  %s3 = inlined_call_operand.hbm [shape: bf16[32,32], index: 3, kind: input, shape index: {}]
  %s4 = inlined_call_operand.vmem [shape: f32[1,32], index: 4, kind: input, shape index: {}]
  %s5 = inlined_call_operand.vmem [shape: bf16[32,128], index: 5, kind: input, shape index: {}]
  %s6 = inlined_call_operand.vmem [shape: f32[1,128], index: 6, kind: input, shape index: {}]
  %s7 = inlined_call_operand.hbm [shape: f32[8,128], index: 7, kind: output, shape index: {}]
  %s8 = sld [smem:[#allocation0]]
  $region50: #{tpu_custom_call.1} parent=0
    _
  %s10 = ssub.s32 1, %s8
  %s11 = scalar_select 0, %s10, %s8
  $region1: #{tpu_custom_call.1} parent=0
    #allocation2 [shape = 'u8[2048]{0}', space=vmem, size = 0x800, scoped, tag = 'input window, operand 0, single buffered']
    #allocation3 [shape = 's32[1]{0}', space=sflag, size = 0x4, scoped, tag = 'scoped memory for tpu_custom_call.1']
    #allocation4 [shape = 's32[1]{0}', space=sflag, size = 0x4, scoped, tag = 'scoped memory for tpu_custom_call.1']
    #allocation5 [shape = 'u8[4096]{0}', space=vmem, size = 0x1000, scoped, tag = 'input window, operand 1, single buffered']
    #allocation6 [shape = 's32[1]{0}', space=sflag, size = 0x4, scoped, tag = 'scoped memory for tpu_custom_call.1']
    #allocation7 [shape = 'u8[8192]{0}', space=vmem, size = 0x2000, scoped, tag = 'input window, operand 3, single buffered']
    #allocation8 [shape = 'u8[4096]{0}', space=vmem, size = 0x1000, scoped, tag = 'output window, operand 0, single buffered']
    %12 = vsyncpa [#allocation3], 0
    %13 = vsyncpa [#allocation6], 0
    %14 = vsyncpa [#allocation4], 0
    // Predicated region
    $region2: #{tpu_custom_call.1} parent=1 // pred_check
      _
    $region3: #{tpu_custom_call.1} parent=1 // pred_check_branch
      %16 = sbr.rel (0) target = $region5
    $region4: #{tpu_custom_call.1} parent=1 // pred_region
      %s18 = ssub.s32 64, 64
      %19 = vsyncadd [#allocation3], %s18
      %s21 = sshll.u32 [#allocation2], 4
      %s22 = int_to_ptr.vmem [resolvable:$true] %s21
      %24 = dma.hbm_to_vmem [thread:$0]  %s0, 64, %s22, [#allocation3]
    $region5: #{tpu_custom_call.1} parent=1 // pred_fallthru
      _
    // Predicated region
    $region6: #{tpu_custom_call.1} parent=1 // pred_check
      _
    $region7: #{tpu_custom_call.1} parent=1 // pred_check_branch
      %26 = sbr.rel (0) target = $region9
    $region8: #{tpu_custom_call.1} parent=1 // pred_region
      %s28 = ssub.s32 128, 128
      %29 = vsyncadd [#allocation6], %s28
      %s30 = sshll.u32 [#allocation5], 4
      %s31 = int_to_ptr.vmem [resolvable:$true] %s30
      %36 = dma.hbm_to_vmem [thread:$0]  %s1, 128, %s31, [#allocation6], 64, 64, 4
    $region9: #{tpu_custom_call.1} parent=1 // pred_fallthru
      _
    // Predicated region
    $region10: #{tpu_custom_call.1} parent=1 // pred_check
      _
    $region11: #{tpu_custom_call.1} parent=1 // pred_check_branch
      %38 = sbr.rel (0) target = $region13
    $region12: #{tpu_custom_call.1} parent=1 // pred_region
      _
    $region13: #{tpu_custom_call.1} parent=1 // pred_fallthru
      _
    // Predicated region
    $region14: #{tpu_custom_call.1} parent=1 // pred_check
      _
    $region15: #{tpu_custom_call.1} parent=1 // pred_check_branch
      %40 = sbr.rel (0) target = $region17
    $region16: #{tpu_custom_call.1} parent=1 // pred_region
      %s42 = ssub.s32 256, 256
      %43 = vsyncadd [#allocation6], %s42
      %s44 = sshll.u32 [#allocation7], 4
      %s45 = int_to_ptr.vmem [resolvable:$true] %s44
      %50 = dma.hbm_to_vmem [thread:$0]  %s3, 256, %s45, [#allocation6], 64, 64, 4
    $region17: #{tpu_custom_call.1} parent=1 // pred_fallthru
      _
    // Predicated region
    $region18: #{tpu_custom_call.1} parent=1 // pred_check
      _
    $region19: #{tpu_custom_call.1} parent=1 // pred_check_branch
      %52 = sbr.rel (0) target = $region21
    $region20: #{tpu_custom_call.1} parent=1 // pred_region
      _
    $region21: #{tpu_custom_call.1} parent=1 // pred_fallthru
      _
    // Predicated region
    $region22: #{tpu_custom_call.1} parent=1 // pred_check
      _
    $region23: #{tpu_custom_call.1} parent=1 // pred_check_branch
      %54 = sbr.rel (0) target = $region25
    $region24: #{tpu_custom_call.1} parent=1 // pred_region
      _
    $region25: #{tpu_custom_call.1} parent=1 // pred_fallthru
      _
    // Predicated region
    $region26: #{tpu_custom_call.1} parent=1 // pred_check
      _
    $region27: #{tpu_custom_call.1} parent=1 // pred_check_branch
      %56 = sbr.rel (0) target = $region29
    $region28: #{tpu_custom_call.1} parent=1 // pred_region
      _
    $region29: #{tpu_custom_call.1} parent=1 // pred_fallthru
      _
    // Predicated region
    $region30: #{tpu_custom_call.1} parent=1 // pred_check
      _
    $region31: #{tpu_custom_call.1} parent=1 // pred_check_branch
      %58 = sbr.rel (0) target = $region33
    $region32: #{tpu_custom_call.1} parent=1 // pred_region
      %59 = dma.done [#allocation3], 64
    $region33: #{tpu_custom_call.1} parent=1 // pred_fallthru
      _
    // Predicated region
    $region34: #{tpu_custom_call.1} parent=1 // pred_check
      _
    $region35: #{tpu_custom_call.1} parent=1 // pred_check_branch
      %61 = sbr.rel (0) target = $region37
    $region36: #{tpu_custom_call.1} parent=1 // pred_region
      %62 = dma.done [#allocation6], 128
    $region37: #{tpu_custom_call.1} parent=1 // pred_fallthru
      _
    // Predicated region
    $region38: #{tpu_custom_call.1} parent=1 // pred_check
      _
    $region39: #{tpu_custom_call.1} parent=1 // pred_check_branch
      %64 = sbr.rel (0) target = $region41
    $region40: #{tpu_custom_call.1} parent=1 // pred_region
      %65 = dma.done [#allocation6], 256
    $region41: #{tpu_custom_call.1} parent=1 // pred_fallthru
      _
    %v67 = vld [vmem:[#allocation2] sm:$0xf]
    %v68 = vld [vmem:[#allocation5] sm:$0xf]
    %v69 = vld [vmem:[#allocation5 + $0x4] sm:$0xf]
    %v70 = vld [vmem:[%s2] sm:$0x1]
    %v72 = vlaneseq
    %v73 = vshrl.u32 %v72, 7
    %v74 = vsub.s32 0, %v73
    %v75 = vrot.slane %v70, %v74
    %v79 = vunpack.c.l.b16 %v68
    %v80 = vunpack.c.l.b16 %v69
    %v81 = vpack.c.b16 %v80, %v79
    %vm83 = vcmask 130048
    %v85 = vsel %vm83, %v67, 0
    %87 = vmatprep.subr.bf16.mxu0 0
    %88 = vmatpush1.bf16.msra.mxu0 %v81
    %89 = vmatprep.subr.bf16.mxu0 0
    %90 = vmatpush1.bf16.msra.mxu0 0
    %91 = vmatprep.subr.bf16.mxu0 0
    %92 = vmatpush1.bf16.msra.mxu0 0
    %93 = vmatprep.subr.bf16.mxu0 0
    %94 = vmatpush1.bf16.msra.mxu0 0
    %95 = vmatprep.subr.bf16.mxu0 0
    %96 = vmatpush1.bf16.msra.mxu0 0
    %97 = vmatprep.subr.bf16.mxu0 0
    %98 = vmatpush1.bf16.msra.mxu0 0
    %99 = vmatprep.subr.bf16.mxu0 0
    %100 = vmatpush1.bf16.msra.mxu0 0
    %101 = vmatprep.subr.bf16.mxu0 0
    %102 = vmatpush1.bf16.msra.mxu0 0
    %103 = vmatprep.subr.bf16.mxu0 0
    %104 = vmatpush1.bf16.msra.mxu0 0
    %105 = vmatprep.subr.bf16.mxu0 0
    %106 = vmatpush1.bf16.msra.mxu0 0
    %107 = vmatprep.subr.bf16.mxu0 0
    %108 = vmatpush1.bf16.msra.mxu0 0
    %109 = vmatprep.subr.bf16.mxu0 0
    %110 = vmatpush1.bf16.msra.mxu0 0
    %111 = vmatprep.subr.bf16.mxu0 0
    %112 = vmatpush1.bf16.msra.mxu0 0
    %113 = vmatprep.subr.bf16.mxu0 0
    %114 = vmatpush1.bf16.msra.mxu0 0
    %115 = vmatprep.subr.bf16.mxu0 0
    %116 = vmatpush1.bf16.msra.mxu0 0
    %117 = vmatprep.subr.bf16.mxu0 0
    %118 = vmatpush1.bf16.msra.mxu0 0
    %119 = vmatprep.mubr.bf16.mxu0 0
    %120 = vmatmul.mubr.bf16.gmra.mrb[0].mxu0 %v85
    %v121 = vpop.f32.mrb[0].mxu0
    %v122 = vadd.f32 %v75, %v121
    %v123 = vpop.f32.mrb[0].mxu0
    %v124 = vpop.f32.mrb[0].mxu0
    %v125 = vpop.f32.mrb[0].mxu0
    %126 = vdwg.mxu0
    %v127 = vmax.f32 %v122, 0.0
    %v128 = vpack.c.bf16 %v127, %v127
    %v129 = vld [vmem:[#allocation7] sm:$0xf]
    %v130 = vld [vmem:[#allocation7 + $0x4] sm:$0xf]
    %v131 = vld [vmem:[#allocation7 + $0x8] sm:$0xf]
    %v132 = vld [vmem:[#allocation7 + $0xc] sm:$0xf]
    %v133 = vld [vmem:[%s4] sm:$0x1]
    %v135 = vlaneseq
    %v136 = vshrl.u32 %v135, 7
    %v137 = vsub.s32 0, %v136
    %v138 = vrot.slane %v133, %v137
    %v144 = vunpack.c.l.b16 %v129
    %v145 = vunpack.c.l.b16 %v130
    %v146 = vunpack.c.l.b16 %v131
    %v147 = vunpack.c.l.b16 %v132
    %v148 = vpack.c.b16 %v145, %v144
    %v149 = vpack.c.b16 %v147, %v146
    %vm152 = vcmask 261120
    %v154 = vsel %vm152, %v128, 0
    %156 = vmatprep.subr.bf16.mxu0 0
    %157 = vmatpush1.bf16.msra.mxu0 %v148
    %158 = vmatprep.subr.bf16.mxu0 0
    %159 = vmatpush1.bf16.msra.mxu0 %v149
    %160 = vmatprep.subr.bf16.mxu0 0
    %161 = vmatpush1.bf16.msra.mxu0 0
    %162 = vmatprep.subr.bf16.mxu0 0
    %163 = vmatpush1.bf16.msra.mxu0 0
    %164 = vmatprep.subr.bf16.mxu0 0
    %165 = vmatpush1.bf16.msra.mxu0 0
    %166 = vmatprep.subr.bf16.mxu0 0
    %167 = vmatpush1.bf16.msra.mxu0 0
    %168 = vmatprep.subr.bf16.mxu0 0
    %169 = vmatpush1.bf16.msra.mxu0 0
    %170 = vmatprep.subr.bf16.mxu0 0
    %171 = vmatpush1.bf16.msra.mxu0 0
    %172 = vmatprep.subr.bf16.mxu0 0
    %173 = vmatpush1.bf16.msra.mxu0 0
    %174 = vmatprep.subr.bf16.mxu0 0
    %175 = vmatpush1.bf16.msra.mxu0 0
    %176 = vmatprep.subr.bf16.mxu0 0
    %177 = vmatpush1.bf16.msra.mxu0 0
    %178 = vmatprep.subr.bf16.mxu0 0
    %179 = vmatpush1.bf16.msra.mxu0 0
    %180 = vmatprep.subr.bf16.mxu0 0
    %181 = vmatpush1.bf16.msra.mxu0 0
    %182 = vmatprep.subr.bf16.mxu0 0
    %183 = vmatpush1.bf16.msra.mxu0 0
    %184 = vmatprep.subr.bf16.mxu0 0
    %185 = vmatpush1.bf16.msra.mxu0 0
    %186 = vmatprep.subr.bf16.mxu0 0
    %187 = vmatpush1.bf16.msra.mxu0 0
    %188 = vmatprep.mubr.bf16.mxu0 0
    %189 = vmatmul.mubr.bf16.gmra.mrb[0].mxu0 %v154
    %v190 = vpop.f32.mrb[0].mxu0
    %v191 = vadd.f32 %v138, %v190
    %v192 = vpop.f32.mrb[0].mxu0
    %v193 = vpop.f32.mrb[0].mxu0
    %v194 = vpop.f32.mrb[0].mxu0
    %195 = vdwg.mxu0
    %v196 = vmax.f32 %v191, 0.0
    %v197 = vpack.c.bf16 %v196, %v196
    %v198 = vld [vmem:[%s5] sm:$0xf]
    %v199 = vld [vmem:[%s5 + $0x4] sm:$0xf]
    %v200 = vld [vmem:[%s5 + $0x8] sm:$0xf]
    %v201 = vld [vmem:[%s5 + $0xc] sm:$0xf]
    %v202 = vld [vmem:[%s6] sm:$0x1]
    %v204 = vlaneseq
    %v205 = vshrl.u32 %v204, 7
    %v206 = vsub.s32 0, %v205
    %v207 = vrot.slane %v202, %v206
    %v213 = vunpack.c.l.b16 %v198
    %v214 = vunpack.c.l.b16 %v199
    %v215 = vunpack.c.l.b16 %v200
    %v216 = vunpack.c.l.b16 %v201
    %v217 = vpack.c.b16 %v214, %v213
    %v218 = vpack.c.b16 %v216, %v215
    %v222 = vsel %vm152, %v197, 0
    %224 = vmatprep.subr.bf16.mxu0 0
    %225 = vmatpush1.bf16.msra.mxu0 %v217
    %226 = vmatprep.subr.bf16.mxu0 0
    %227 = vmatpush1.bf16.msra.mxu0 %v218
    %228 = vmatprep.subr.bf16.mxu0 0
    %229 = vmatpush1.bf16.msra.mxu0 0
    %230 = vmatprep.subr.bf16.mxu0 0
    %231 = vmatpush1.bf16.msra.mxu0 0
    %232 = vmatprep.subr.bf16.mxu0 0
    %233 = vmatpush1.bf16.msra.mxu0 0
    %234 = vmatprep.subr.bf16.mxu0 0
    %235 = vmatpush1.bf16.msra.mxu0 0
    %236 = vmatprep.subr.bf16.mxu0 0
    %237 = vmatpush1.bf16.msra.mxu0 0
    %238 = vmatprep.subr.bf16.mxu0 0
    %239 = vmatpush1.bf16.msra.mxu0 0
    %240 = vmatprep.subr.bf16.mxu0 0
    %241 = vmatpush1.bf16.msra.mxu0 0
    %242 = vmatprep.subr.bf16.mxu0 0
    %243 = vmatpush1.bf16.msra.mxu0 0
    %244 = vmatprep.subr.bf16.mxu0 0
    %245 = vmatpush1.bf16.msra.mxu0 0
    %246 = vmatprep.subr.bf16.mxu0 0
    %247 = vmatpush1.bf16.msra.mxu0 0
    %248 = vmatprep.subr.bf16.mxu0 0
    %249 = vmatpush1.bf16.msra.mxu0 0
    %250 = vmatprep.subr.bf16.mxu0 0
    %251 = vmatpush1.bf16.msra.mxu0 0
    %252 = vmatprep.subr.bf16.mxu0 0
    %253 = vmatpush1.bf16.msra.mxu0 0
    %254 = vmatprep.subr.bf16.mxu0 0
    %255 = vmatpush1.bf16.msra.mxu0 0
    %256 = vmatprep.mubr.bf16.mxu0 0
    %257 = vmatmul.mubr.bf16.gmra.mrb[0].mxu0 %v222
    %v258 = vpop.f32.mrb[0].mxu0
    %v259 = vadd.f32 %v207, %v258
    %v260 = vpop.f32.mrb[0].mxu0
    %v261 = vpop.f32.mrb[0].mxu0
    %v262 = vpop.f32.mrb[0].mxu0
    %263 = vdwg.mxu0
    %v264 = vlaneseq
    %v265 = vand.u32 %v264, 127
    %vm266 = vcmp.lt.s32.totalorder %v265, 8
    %v267 = vsel %vm266, %v259, -inf
    %268 = vmax.xlane.f32.xlu0 %v267
    %v269 = vpop.xlane.xlu0 %268
    %v270 = vsub.f32 %v267, %v269
    %v271 = vmul.f32 %v270, 1.442695
    %v272 = vpow.pop %v271
    %273 = vadd.xlane.f32.xlu0 %v272
    %v274 = vpop.xlane.xlu0 %273
    %v275 = vrcp.pop %v274
    %v276 = vmul.f32 %v272, %v275
    %vm277 = vcmp.eq.s32.totalorder %v265, 8
    %v278 = vsel %vm277, %v259, 0.0
    %v279 = vadd.f32 %v276, %v278
    %280 = vst [vmem:[#allocation8] sm:$0xff] %v279
    // Predicated region
    $region42: #{tpu_custom_call.1} parent=1 // pred_check
      _
    $region43: #{tpu_custom_call.1} parent=1 // pred_check_branch
      %282 = sbr.rel (0) target = $region45
    $region44: #{tpu_custom_call.1} parent=1 // pred_region
      %s284 = ssub.s32 128, 128
      %285 = vsyncadd [#allocation4], %s284
      %s287 = sshll.u32 [#allocation8], 4
      %s288 = int_to_ptr.vmem [resolvable:$true] %s287
      %290 = dma.vmem_to_hbm [thread:$0]  %s288, 128, %s7, [#allocation4]
    $region45: #{tpu_custom_call.1} parent=1 // pred_fallthru
      _
    // Predicated region
    $region46: #{tpu_custom_call.1} parent=1 // pred_check
      _
    $region47: #{tpu_custom_call.1} parent=1 // pred_check_branch
      %292 = sbr.rel (0) target = $region49
    $region48: #{tpu_custom_call.1} parent=1 // pred_region
      %293 = dma.done [#allocation4], 128
    $region49: #{tpu_custom_call.1} parent=1 // pred_fallthru
      _
    %294 = vsyncpa [#allocation3], 1
    %295 = vsyncpa [#allocation6], 1
    %296 = vsyncpa [#allocation4], 1

</llo_original>
